<compile_context>
chip_gen: v6e
topology: v6e:2x2x1
jax: 0.10.0
libtpu: 0.0.40
codegen_flags: <defaults>
</compile_context>

<pallas_src>
import functools

import jax
import jax.numpy as jnp
from jax.experimental import pallas as pl
from jax.experimental.pallas import tpu as pltpu

_LANE = 128
_ROW_ALIGN = 32                   # covers f32(8) / bf16(16) / int8(32) sublane tiles
_RAGGED_LANE_BLOCK = 128 * 1024   # lane-block (elements) for the ragged (1, n) path


@functools.lru_cache(maxsize=1)
def _tile_config():
    """(target_block_bytes, vmem_limit_bytes) picked per TPU generation.

    v5e / v6e (128 MiB physical VMEM): 4 MiB blocks -> 2 in + 2 out buffers =
    16 MiB, inside an explicit 32 MiB scoped-VMEM limit.
    v7x-class (<= ~64 MiB VMEM per TC, 3.2 TB/s HBM): 8 MiB blocks so the
    ~0.35 us fixed per-grid-step cost is <10% of each step's DMA time; the
    32 MiB of buffers needs the limit raised explicitly to 48 MiB.
    """
    block_bytes = 4 * 1024 * 1024
    vmem_limit = 32 * 1024 * 1024
    try:
        vmem_cap = int(pltpu.get_tpu_info().vmem_capacity_bytes)
        if vmem_cap <= 96 * 1024 * 1024:      # v7x-class TensorCore
            block_bytes = 8 * 1024 * 1024
            vmem_limit = 48 * 1024 * 1024
    except Exception:
        pass                                   # unknown chip -> conservative default
    return block_bytes, vmem_limit


def _affine_kernel(params_ref, x_ref, o_ref):
    # y = x * scale + bias; scale/bias are SMEM scalars (one kernel, any params).
    scale = params_ref[0]
    bias = params_ref[1]
    x = x_ref[...].astype(jnp.float32)
    o_ref[...] = (x * scale + bias).astype(o_ref.dtype)


def _pallas_affine(x2d, params, out_dtype, rb, wb, vmem_limit):
    """Run the affine kernel over a 2-D slab with (rb, wb) blocks."""
    rows, w = x2d.shape
    grid = (pl.cdiv(rows, rb), pl.cdiv(w, wb))
    return pl.pallas_call(
        _affine_kernel,
        out_shape=jax.ShapeDtypeStruct((rows, w), out_dtype),
        grid=grid,
        in_specs=[
            pl.BlockSpec(memory_space=pltpu.MemorySpace.SMEM),   # (2,) scale/bias
            pl.BlockSpec((rb, wb), lambda i, j: (i, j)),
        ],
        out_specs=pl.BlockSpec((rb, wb), lambda i, j: (i, j)),
        compiler_params=pltpu.CompilerParams(
            dimension_semantics=("parallel", "parallel"),
            vmem_limit_bytes=vmem_limit,
        ),
    )(params, x2d)


def _pick_row_block(rows, w, itemsize, target_block_bytes):
    """Row tile: ~target_block_bytes, 32-aligned, >=2 grid steps for mid sizes."""
    target_rows = max(_ROW_ALIGN, target_block_bytes // (w * itemsize))
    target_rows = max(_ROW_ALIGN, (target_rows // _ROW_ALIGN) * _ROW_ALIGN)
    if rows > target_rows:
        return target_rows
    # Mid-size: split into >=2 (ideally 4) blocks so in/out DMAs of adjacent
    # steps overlap and both v7x TensorCores get work.  Tiny inputs stay single.
    if rows >= 4 * _ROW_ALIGN:
        n_blocks = 4
    elif rows >= 2 * _ROW_ALIGN:
        n_blocks = 2
    else:
        return rows                          # full-extent block (always legal)
    rb = -(-rows // n_blocks)                # ceil(rows / n_blocks)
    rb = -(-rb // _ROW_ALIGN) * _ROW_ALIGN   # round up to 32 sublanes
    return min(rb, rows)


@jax.jit
def _normalize_fwd(x, params):
    orig_shape = x.shape
    in_dtype = x.dtype
    # Torch promotion: float tensors keep their dtype vs the 0-dim float param;
    # integer/bool inputs promote to float32.
    out_dtype = in_dtype if jnp.issubdtype(in_dtype, jnp.floating) else jnp.float32
    n = x.size
    if n == 0:
        return x.astype(out_dtype)

    block_bytes, vmem_limit = _tile_config()
    itemsize = max(jnp.dtype(in_dtype).itemsize, jnp.dtype(out_dtype).itemsize)

    # Fast path: lane-dense 2-D view [rows, W], W a multiple of 128 (no padding;
    # reshape of a contiguous array is free).
    w = None
    for cand in (1024, 512, 256, 128):
        if n % cand == 0:
            w = cand
            break

    if w is not None:
        x2d = x.reshape(-1, w)
        rows = x2d.shape[0]
        rb = _pick_row_block(rows, w, itemsize, block_bytes)
        out = _pallas_affine(x2d, params, out_dtype, rb, w, vmem_limit)
        return out.reshape(orig_shape)

    # Ragged element count: same kernel on a (1, n) view, blocking the lane axis.
    # Pallas edge-masks the partial last block -> no jnp.pad / [:n] slice passes.
    x2d = x.reshape(1, n)
    wb = n if n <= _RAGGED_LANE_BLOCK else _RAGGED_LANE_BLOCK
    out = _pallas_affine(x2d, params, out_dtype, 1, wb, vmem_limit)
    return out.reshape(orig_shape)


class Normalize:
    """JAX/Pallas port of the PyTorch Normalize module (forward pass only).

    distribution: None | 'normal' | 'uniform'
    """

    def __init__(self, distribution=None, **kwargs):
        self.distribution = distribution
        self.data_ = []
        if distribution is None:
            self.param = None
            self._params = None
        elif distribution == "normal":
            mean = float(kwargs.get("mean", 0))
            std = float(kwargs.get("std", 1))
            self.param = jnp.array([mean, std], dtype=jnp.float32)
            self._params = jnp.array([1.0 / std, -mean / std], dtype=jnp.float32)
        elif distribution == "uniform":
            vmin = float(kwargs.get("minv", 0))
            vmax = float(kwargs.get("maxv", 1))
            self.param = jnp.array([vmin, vmax], dtype=jnp.float32)
            scale = 1.0 / (vmax - vmin + 1e-5)
            self._params = jnp.array([scale, -vmin * scale], dtype=jnp.float32)
        else:
            raise NotImplementedError()

    def __call__(self, x, keep_data=False):
        if keep_data:
            # TODO(synk): reset_parameters() host-side statistics accumulation has
            # no kernel equivalent; we only stash the flattened data like torch.
            self.data_.append(jnp.reshape(x, (-1,)))
            return x
        if self.distribution is None:
            return x
        if self.distribution in ("normal", "uniform"):
            return _normalize_fwd(x, self._params)
        raise NotImplementedError()


if __name__ == "__main__":
    key = jax.random.PRNGKey(0)
    k0, k1, k2, k3 = jax.random.split(key, 4)

    x = jax.random.normal(k0, (2, 4, 16, 16), dtype=jnp.float32)

    # distribution=None -> identity
    m_none = Normalize(None)
    y_none = m_none(x)

    # normal: (x - mean) / std
    m_norm = Normalize("normal", mean=0.5, std=2.0)
    y_norm = m_norm(x)

    # uniform: (x - minv) / (maxv - minv + 1e-5)  -- same shape/dtype -> jit cache hit
    m_unif = Normalize("uniform", minv=-1.0, maxv=1.0)
    y_unif = m_unif(x)

    # Ragged element count (3*5*7*11 = 1155): pad-free (1, n) lane-blocked path.
    x_rag = jax.random.normal(k1, (3, 5, 7, 11), dtype=jnp.float32)
    y_rag = m_norm(x_rag)

    # bf16 input (dtype-aware tiling; float dtype preserved, matching torch).
    x_bf16 = jax.random.normal(k2, (4, 4, 32, 32), dtype=jnp.bfloat16)
    y_bf16 = m_norm(x_bf16)

    # Medium input: exercises the multi-block (>=4 grid steps) pipelined path.
    x_med = jax.random.normal(k3, (8, 128, 1024), dtype=jnp.float32)
    y_med = m_norm(x_med)

    # Integer input promotes to float32 (torch-style promotion).
    x_int = jnp.arange(256, dtype=jnp.int32).reshape(4, 64)
    y_int = m_norm(x_int)

    jax.block_until_ready((y_none, y_norm, y_unif, y_rag, y_bf16, y_med, y_int))

    # Correctness checks against plain-JAX references.
    ref_norm = (x - 0.5) / 2.0
    ref_unif = (x - (-1.0)) / (1.0 - (-1.0) + 1e-5)
    ref_rag = (x_rag - 0.5) / 2.0
    ref_bf16 = ((x_bf16.astype(jnp.float32) - 0.5) / 2.0).astype(jnp.bfloat16)
    ref_med = (x_med - 0.5) / 2.0
    ref_int = (x_int.astype(jnp.float32) - 0.5) / 2.0

    assert y_none.shape == x.shape and y_norm.shape == x.shape
    assert y_norm.dtype == x.dtype and y_bf16.dtype == x_bf16.dtype
    assert y_int.dtype == jnp.float32
    assert jnp.allclose(y_none, x)
    assert jnp.allclose(y_norm, ref_norm, atol=1e-5, rtol=1e-5)
    assert jnp.allclose(y_unif, ref_unif, atol=1e-5, rtol=1e-5)
    assert jnp.allclose(y_rag, ref_rag, atol=1e-5, rtol=1e-5)
    assert jnp.allclose(y_med, ref_med, atol=1e-5, rtol=1e-5)
    assert jnp.allclose(y_int, ref_int, atol=1e-5, rtol=1e-5)
    assert jnp.allclose(y_bf16.astype(jnp.float32), ref_bf16.astype(jnp.float32),
                        atol=1e-2, rtol=1e-2)

    print("KERNEL_OK")
</pallas_src>

<mosaic_0001>
module attributes {stable_mosaic.version = 11 : i64} {
  func.func @_affine_kernel(%arg0: i32, %arg1: i32, %arg2: memref<2xf32, #tpu.memory_space<smem>>, %arg3: memref<2x1024xf32, #tpu.memory_space<vmem>>, %arg4: memref<2x1024xf32, #tpu.memory_space<vmem>>) attributes {dimension_semantics = [#tpu.dimension_semantics<parallel>, #tpu.dimension_semantics<parallel>], iteration_bounds = array<i64: 1, 1>, scalar_prefetch = 0 : i64, scratch_operands = 0 : i64, tpu.core_type = #tpu.core_type<tc>, window_params = [{transform_indices = @transform_0, window_bounds = array<i64: 2>}, {transform_indices = @transform_1, window_bounds = array<i64: 2, 1024>}, {transform_indices = @transform_2, window_bounds = array<i64: 2, 1024>}]} {
    %c0 = arith.constant 0 : index
    %0 = memref.load %arg2[%c0] : memref<2xf32, #tpu.memory_space<smem>>
    %c1 = arith.constant 1 : index
    %1 = memref.load %arg2[%c1] : memref<2xf32, #tpu.memory_space<smem>>
    %c0_0 = arith.constant 0 : index
    %c0_1 = arith.constant 0 : index
    %2 = vector.load %arg3[%c0_0, %c0_1] : memref<2x1024xf32, #tpu.memory_space<vmem>>, vector<2x1024xf32>
    %3 = vector.broadcast %0 : f32 to vector<2x1024xf32>
    %4 = arith.mulf %2, %3 : vector<2x1024xf32>
    %5 = vector.broadcast %1 : f32 to vector<2x1024xf32>
    %6 = arith.addf %4, %5 : vector<2x1024xf32>
    %c0_2 = arith.constant 0 : index
    %c0_3 = arith.constant 0 : index
    %7 = vector.load %arg4[%c0_2, %c0_3] : memref<2x1024xf32, #tpu.memory_space<vmem>>, vector<2x1024xf32>
    tpu.vector_store %arg4[%c0_2, %c0_3], %6 {strides = array<i32>} : memref<2x1024xf32, #tpu.memory_space<vmem>>, vector<2x1024xf32>,
    return
  }
  func.func @transform_0(%arg0: i32, %arg1: i32) -> i32 {
    %c0_i32 = arith.constant 0 : i32
    %c0_i32_0 = arith.constant 0 : i32
    return %c0_i32 : i32
  }
  func.func @transform_1(%arg0: i32, %arg1: i32) -> (i32, i32) {
    %c0_i32 = arith.constant 0 : i32
    return %arg0, %arg1 : i32, i32
  }
  func.func @transform_2(%arg0: i32, %arg1: i32) -> (i32, i32) {
    %c0_i32 = arith.constant 0 : i32
    return %arg0, %arg1 : i32, i32
  }
}

</mosaic_0001>

<llo_original>
// kernel: _normalize_fwd.1
$region0: #{_normalize_fwd.1}
  #allocation0 [shape = 'u32[]', space=smem, size = 0x4, offset = 0x4, fixed_abs, tag = 'smem constant byte address 0x4 - core index']
  #allocation1 [shape = 'u32[144,128]{1,0:T(1,128)}', space=vmem, size = 0x12000, scoped, tag = 'internal scratch']
  %s0 = inlined_call_operand.vmem [shape: f32[2], index: 0, kind: input, shape index: {}]
  %s1 = inlined_call_operand.vmem [shape: f32[2,1024], index: 1, kind: input, shape index: {}]
  %s2 = inlined_call_operand.vmem [shape: f32[2,1024], index: 2, kind: output, shape index: {}]
  %s3 = sld [smem:[#allocation0]]
  $region22: #{_normalize_fwd.1} parent=0
    _
  %s5 = ssub.s32 1, %s3
  %s6 = scalar_select 0, %s5, %s3
  $region1: #{_normalize_fwd.1} parent=0
    #allocation2 [shape = 'u8[512]{0}', space=smem, size = 0x200, scoped, tag = 'input window, operand 0, single buffered']
    #allocation3 [shape = 's32[1]{0}', space=sflag, size = 0x4, scoped, tag = 'scoped memory for _normalize_fwd.1']
    %7 = vsyncpa [#allocation3], 0
    // Predicated region
    $region2: #{_normalize_fwd.1} parent=1 // pred_check
      _
    $region3: #{_normalize_fwd.1} parent=1 // pred_check_branch
      %9 = sbr.rel (0) target = $region5
    $region4: #{_normalize_fwd.1} parent=1 // pred_region
      %s11 = ssub.s32 16, 16
      %12 = vsyncadd [#allocation3], %s11
      %s14 = sshll.u32 %s0, 4
      %s15 = int_to_ptr.vmem [resolvable:$true] %s14
      %17 = dma.vmem_to_smem %s15, 16, [#allocation2], [#allocation3]
    $region5: #{_normalize_fwd.1} parent=1 // pred_fallthru
      _
    // Predicated region
    $region6: #{_normalize_fwd.1} parent=1 // pred_check
      _
    $region7: #{_normalize_fwd.1} parent=1 // pred_check_branch
      %19 = sbr.rel (0) target = $region9
    $region8: #{_normalize_fwd.1} parent=1 // pred_region
      _
    $region9: #{_normalize_fwd.1} parent=1 // pred_fallthru
      _
    // Predicated region
    $region10: #{_normalize_fwd.1} parent=1 // pred_check
      _
    $region11: #{_normalize_fwd.1} parent=1 // pred_check_branch
      %21 = sbr.rel (0) target = $region13
    $region12: #{_normalize_fwd.1} parent=1 // pred_region
      %22 = dma.done [#allocation3], 16
    $region13: #{_normalize_fwd.1} parent=1 // pred_fallthru
      _
    %23 = sfence
    %s24 = sld [smem:[#allocation2]]
    %s25 = sld [smem:[#allocation2 + $0x1]]
    %v26 = vld [vmem:[%s1] sm:$0xff]
    %v27 = vld [vmem:[%s1 + $0x8] sm:$0xff]
    %v28 = vstv %s24
    %v29 = vmul.f32 %v26, %v28
    %v30 = vmul.f32 %v27, %v28
    %v31 = vstv %s25
    %v32 = vadd.f32 %v29, %v31
    %v33 = vadd.f32 %v30, %v31
    %34 = vst [vmem:[%s2] sm:$0xff] %v32
    %35 = vst [vmem:[%s2 + $0x8] sm:$0xff] %v33
    // Predicated region
    $region14: #{_normalize_fwd.1} parent=1 // pred_check
      _
    $region15: #{_normalize_fwd.1} parent=1 // pred_check_branch
      %37 = sbr.rel (0) target = $region17
    $region16: #{_normalize_fwd.1} parent=1 // pred_region
      _
    $region17: #{_normalize_fwd.1} parent=1 // pred_fallthru
      _
    // Predicated region
    $region18: #{_normalize_fwd.1} parent=1 // pred_check
      _
    $region19: #{_normalize_fwd.1} parent=1 // pred_check_branch
      %39 = sbr.rel (0) target = $region21
    $region20: #{_normalize_fwd.1} parent=1 // pred_region
      _
    $region21: #{_normalize_fwd.1} parent=1 // pred_fallthru
      _
    %40 = vsyncpa [#allocation3], 1

</llo_original>
